<compile_context>
chip_gen: v7x
topology: tpu7x:2x2x1
jax: 0.10.0
libtpu: 0.0.40
codegen_flags: <defaults>
</compile_context>

<pallas_src>
import jax
import jax.numpy as jnp
from jax.experimental import pallas as pl
from jax.experimental.pallas import tpu as pltpu


# ---------------------------------------------------------------------------
# Path 1: recommended forward — no kernel at all.
# ---------------------------------------------------------------------------
def identity(x: jax.Array) -> jax.Array:
    """Identity forward pass. No pallas_call: cheapest possible, fully fusible."""
    return x


# ---------------------------------------------------------------------------
# Path 2: aliased no-op Pallas kernel (zero traffic iff the input is donated).
# ---------------------------------------------------------------------------
def _identity_alias_kernel(x_hbm_ref, o_hbm_ref):
    # Output is the same HBM buffer as the input (input_output_aliases={0: 0}),
    # so the data is already in place: no DMA, no compute, no VMEM traffic.
    del x_hbm_ref, o_hbm_ref


def identity_aliased(x: jax.Array) -> jax.Array:
    """Identity as an aliased no-op Pallas kernel.

    NOTE: zero HBM traffic only if `x` is donated (dead after this call) at the
    jit boundary; otherwise XLA inserts a defensive full-array copy. Numerics
    are correct either way.
    """
    return pl.pallas_call(
        _identity_alias_kernel,
        out_shape=jax.ShapeDtypeStruct(x.shape, x.dtype),
        in_specs=[pl.BlockSpec(memory_space=pl.ANY)],
        out_specs=pl.BlockSpec(memory_space=pl.ANY),
        input_output_aliases={0: 0},
        cost_estimate=pl.CostEstimate(flops=0, transcendentals=0, bytes_accessed=0),
    )(x)


# ---------------------------------------------------------------------------
# Path 3: fresh copy via one direct HBM -> HBM async DMA (no VMEM staging).
# ---------------------------------------------------------------------------
def _dma_copy_kernel(x_hbm_ref, o_hbm_ref):
    def body(sem):
        cp = pltpu.make_async_copy(x_hbm_ref, o_hbm_ref, sem)
        cp.start()
        cp.wait()

    pl.run_scoped(body, pltpu.SemaphoreType.DMA(()))


_SMALL_BYTES = 256 * 1024  # below this the fixed launch overhead dominates


def identity_copy(x: jax.Array, *, force_kernel: bool = False) -> jax.Array:
    """Identity that returns a fresh copy of `x`.

    Implemented as a single HBM->HBM DMA on the original shape: no grid
    per-step overhead, no vreg round trip, no VMEM budgeting, and no
    pad/slice extra traffic for non-128-divisible element counts.
    """
    nbytes = x.size * jnp.dtype(x.dtype).itemsize
    if not force_kernel and nbytes < _SMALL_BYTES:
        # For tiny tensors the ~1-2 us launch + prologue dominates; let XLA copy.
        return jnp.copy(x)

    return pl.pallas_call(
        _dma_copy_kernel,
        out_shape=jax.ShapeDtypeStruct(x.shape, x.dtype),
        in_specs=[pl.BlockSpec(memory_space=pl.ANY)],
        out_specs=pl.BlockSpec(memory_space=pl.ANY),
        cost_estimate=pl.CostEstimate(
            flops=0, transcendentals=0, bytes_accessed=2 * nbytes
        ),
    )(x)


if __name__ == "__main__":
    key = jax.random.PRNGKey(0)
    # Small NCHW input consistent with the fisher_lenet conv-net context.
    x = jax.random.normal(key, (2, 4, 16, 16), dtype=jnp.float32)

    # 1) Recommended no-kernel passthrough.
    y = identity(x)
    jax.block_until_ready(y)
    assert y.shape == x.shape and y.dtype == x.dtype
    assert jnp.array_equal(y, x), "passthrough identity mismatch"

    # 2) Aliased no-op Pallas kernel.
    y_alias = identity_aliased(x)
    jax.block_until_ready(y_alias)
    assert y_alias.shape == x.shape and y_alias.dtype == x.dtype
    assert jnp.array_equal(y_alias, x), "aliased identity mismatch"

    # 3) Fresh-copy path via direct HBM->HBM DMA (force the kernel so the
    #    Pallas path is actually exercised despite the tiny demo tensor).
    y_copy = identity_copy(x, force_kernel=True)
    jax.block_until_ready(y_copy)
    assert y_copy.shape == x.shape and y_copy.dtype == x.dtype
    assert jnp.array_equal(y_copy, x), "DMA-copy identity mismatch"

    print("KERNEL_OK")
</pallas_src>

<mosaic_0001>
module attributes {stable_mosaic.version = 11 : i64} {
  func.func @_identity_alias_kernel(%arg0: memref<2x4x16x16xf32, #tpu.memory_space<any>>, %arg1: memref<2x4x16x16xf32, #tpu.memory_space<any>>) attributes {dimension_semantics = [], scalar_prefetch = 0 : i64, scratch_operands = 0 : i64, tpu.core_type = #tpu.core_type<tc>} {
    return
  }
}

</mosaic_0001>

<llo_original>
// kernel: tpu_custom_call.1
$region0: #{tpu_custom_call.1}
  #allocation0 [shape = 'u32[]', space=smem, size = 0x4, offset = 0x4, fixed_abs, tag = 'smem constant byte address 0x4 - core index']
  #allocation1 [shape = 'u32[144,128]{1,0:T(1,128)}', space=vmem, size = 0x12000, scoped, tag = 'internal scratch']
  %s0 = inlined_call_operand.hbm [shape: f32[2,4,16,16], index: 0, kind: input, shape index: {}, may-alias: {0,1}]
  %s1 = inlined_call_operand.hbm [shape: f32[2,4,16,16], index: 1, kind: output, shape index: {}, may-alias: {0,1}]
  %s2 = sld [smem:[#allocation0]]
  $region2: #{tpu_custom_call.1} parent=0
    _
  %s4 = ssub.s32 1, %s2
  %s5 = scalar_select 0, %s4, %s2

</llo_original>
